<compile_context>
chip_gen: v5e
topology: v5e:2x2
jax: 0.10.0
libtpu: 0.0.40
codegen_flags: <defaults>
</compile_context>

<pallas_src>
import jax
import jax.numpy as jnp
from jax.experimental import pallas as pl
from jax.experimental.pallas import tpu as pltpu


def residual_block_kernel(x_ref, w1_ref, b1_ref, w2_ref, b2_ref, o_ref):
    # x_ref / o_ref : (B, L, Cp)   w*_ref : (3*Cp, Cp)   b*_ref : (1, Cp)
    x = x_ref[...]                              # (B, L, Cp)
    B, L, Cp = x.shape

    def im2col(t):
        # (B, L, Cp) -> (B*L, 3*Cp) slab [t[l-1] | t[l] | t[l+1]] with zero halo,
        # shifts done per-sample so samples never leak into each other.
        z = jnp.zeros((B, 1, Cp), t.dtype)
        prev = jnp.concatenate([z, t[:, :-1, :]], axis=1)
        nxt = jnp.concatenate([t[:, 1:, :], z], axis=1)
        slab = jnp.concatenate([prev, t, nxt], axis=-1)      # (B, L, 3*Cp)
        return slab.reshape(B * L, 3 * Cp)

    # Conv1 (+ folded BN1 scale) as a single MXU matmul, then shift + ReLU.
    h = jnp.dot(im2col(x), w1_ref[...], preferred_element_type=jnp.float32)
    h = jnp.maximum(h + b1_ref[...], 0.0)                    # (B*L, Cp)

    # Conv2 (+ folded BN2 scale), shift, residual add.
    g = jnp.dot(im2col(h.reshape(B, L, Cp)), w2_ref[...],
                preferred_element_type=jnp.float32)
    g = g + b2_ref[...]                                      # (B*L, Cp)

    o_ref[...] = (x + g.reshape(B, L, Cp)).astype(o_ref.dtype)


def _fold_and_pad_weight(w, scale, C, Cp):
    # w: (3, C, C) laid out (k, c_in, c_out); scale: (C,) per-output-channel BN scale.
    w = w * scale[None, None, :]                 # fold BN scale into conv weights
    w = jnp.pad(w, ((0, 0), (0, Cp - C), (0, Cp - C)))
    return w.reshape(3 * Cp, Cp)                 # rows 0..Cp-1 = tap k=0 (x[l-1]), etc.


def residual_block(x_ncl, w1, s1, b1, w2, s2, b2, *, block_batch=None):
    """x_ncl: (N, C, L) float32. w*: (3, C, C) with w[k, c_in, c_out].
    s*/b*: folded BatchNorm (eval-mode) per-channel scale / shift, shape (C,)."""
    N, C, L = x_ncl.shape
    Cp = ((C + 127) // 128) * 128                # lane-dense channel padding

    # NCL -> NLC and channel pad (padded channels are zero end-to-end).
    # TODO(synk): the two wrapper transposes are separate XLA ops; a NCL-native
    # kernel variant would avoid the extra HBM round-trips.
    x_nlc = jnp.transpose(x_ncl, (0, 2, 1))                      # (N, L, C)
    x_p = jnp.pad(x_nlc, ((0, 0), (0, 0), (0, Cp - C)))          # (N, L, Cp)

    w1p = _fold_and_pad_weight(w1, s1, C, Cp)                    # (3*Cp, Cp)
    w2p = _fold_and_pad_weight(w2, s2, C, Cp)
    b1p = jnp.pad(b1, (0, Cp - C)).reshape(1, Cp)
    b2p = jnp.pad(b2, (0, Cp - C)).reshape(1, Cp)

    # Samples per grid step: amortize per-step overhead, keep >=2 grid steps if possible.
    bb = block_batch if block_batch is not None else min(N, 8)
    bb = max(1, min(bb, N))
    while N % bb:
        bb -= 1

    out_p = pl.pallas_call(
        residual_block_kernel,
        out_shape=jax.ShapeDtypeStruct((N, L, Cp), jnp.float32),
        grid_spec=pltpu.PrefetchScalarGridSpec(
            num_scalar_prefetch=0,
            grid=(N // bb,),
            in_specs=[
                pl.BlockSpec((bb, L, Cp), lambda n: (n, 0, 0)),   # x
                pl.BlockSpec((3 * Cp, Cp), lambda n: (0, 0)),     # w1 (scale-folded)
                pl.BlockSpec((1, Cp), lambda n: (0, 0)),          # shift1
                pl.BlockSpec((3 * Cp, Cp), lambda n: (0, 0)),     # w2 (scale-folded)
                pl.BlockSpec((1, Cp), lambda n: (0, 0)),          # shift2
            ],
            out_specs=pl.BlockSpec((bb, L, Cp), lambda n: (n, 0, 0)),
        ),
        compiler_params=pltpu.CompilerParams(
            dimension_semantics=("parallel",)),
    )(x_p, w1p, b1p, w2p, b2p)

    return jnp.transpose(out_p[:, :, :C], (0, 2, 1))             # back to (N, C, L)


# ------------------------- reference (pure JAX) -------------------------

def _conv1d_ref(x_nlc, w):
    # conv along L, padding=1, stride=1; w: (3, c_in, c_out), tap 0 hits x[l-1]
    xp = jnp.pad(x_nlc, ((0, 0), (1, 1), (0, 0)))
    return (jnp.einsum('nlc,cd->nld', xp[:, :-2, :], w[0])
            + jnp.einsum('nlc,cd->nld', xp[:, 1:-1, :], w[1])
            + jnp.einsum('nlc,cd->nld', xp[:, 2:, :], w[2]))


def _reference(x_ncl, w1, s1, b1, w2, s2, b2):
    x_nlc = jnp.transpose(x_ncl, (0, 2, 1))
    h = _conv1d_ref(x_nlc, w1) * s1[None, None, :] + b1[None, None, :]
    h = jnp.maximum(h, 0.0)
    g = _conv1d_ref(h, w2) * s2[None, None, :] + b2[None, None, :]
    return jnp.transpose(x_nlc + g, (0, 2, 1))


if __name__ == "__main__":
    key = jax.random.PRNGKey(0)
    N, F, L = 8, 32, 16          # batch, channels f, sequence length
    eps = 1e-5

    keys = jax.random.split(key, 12)
    x = jax.random.normal(keys[0], (N, F, L), dtype=jnp.float32)

    # Conv weights: PyTorch stores (out, in, k); we store (k, in, out).
    w1 = jax.random.normal(keys[1], (3, F, F), dtype=jnp.float32) * 0.1
    w2 = jax.random.normal(keys[2], (3, F, F), dtype=jnp.float32) * 0.1

    # BatchNorm1d parameters / running stats (deterministic synthetic values).
    gamma1 = 1.0 + 0.1 * jax.random.normal(keys[3], (F,), dtype=jnp.float32)
    beta1 = 0.1 * jax.random.normal(keys[4], (F,), dtype=jnp.float32)
    mean1 = 0.1 * jax.random.normal(keys[5], (F,), dtype=jnp.float32)
    var1 = jnp.abs(1.0 + 0.1 * jax.random.normal(keys[6], (F,), dtype=jnp.float32))

    gamma2 = 1.0 + 0.1 * jax.random.normal(keys[7], (F,), dtype=jnp.float32)
    beta2 = 0.1 * jax.random.normal(keys[8], (F,), dtype=jnp.float32)
    mean2 = 0.1 * jax.random.normal(keys[9], (F,), dtype=jnp.float32)
    var2 = jnp.abs(1.0 + 0.1 * jax.random.normal(keys[10], (F,), dtype=jnp.float32))

    # Fold BN (eval mode) into per-channel scale/shift.
    s1 = gamma1 / jnp.sqrt(var1 + eps)
    b1 = beta1 - mean1 * s1
    s2 = gamma2 / jnp.sqrt(var2 + eps)
    b2 = beta2 - mean2 * s2

    out = residual_block(x, w1, s1, b1, w2, s2, b2, block_batch=4)  # grid = (2,)
    out = jax.block_until_ready(out)

    ref = _reference(x, w1, s1, b1, w2, s2, b2)
    assert out.shape == (N, F, L)
    assert jnp.max(jnp.abs(out - ref)) < 1e-4

    print("KERNEL_OK")
</pallas_src>

<mosaic_0001>
module attributes {stable_mosaic.version = 11 : i64} {
  func.func @residual_block_kernel(%arg0: i32, %arg1: memref<4x16x128xf32, #tpu.memory_space<vmem>>, %arg2: memref<384x128xf32, #tpu.memory_space<vmem>>, %arg3: memref<1x128xf32, #tpu.memory_space<vmem>>, %arg4: memref<384x128xf32, #tpu.memory_space<vmem>>, %arg5: memref<1x128xf32, #tpu.memory_space<vmem>>, %arg6: memref<4x16x128xf32, #tpu.memory_space<vmem>>) attributes {dimension_semantics = [#tpu.dimension_semantics<parallel>], iteration_bounds = array<i64: 2>, scalar_prefetch = 0 : i64, scratch_operands = 0 : i64, tpu.core_type = #tpu.core_type<tc>, window_params = [{transform_indices = @transform_0, window_bounds = array<i64: 4, 16, 128>}, {pipeline_mode = #tpu.pipeline_mode<synchronous>, transform_indices = @transform_1, window_bounds = array<i64: 384, 128>}, {pipeline_mode = #tpu.pipeline_mode<synchronous>, transform_indices = @transform_2, window_bounds = array<i64: 1, 128>}, {pipeline_mode = #tpu.pipeline_mode<synchronous>, transform_indices = @transform_3, window_bounds = array<i64: 384, 128>}, {pipeline_mode = #tpu.pipeline_mode<synchronous>, transform_indices = @transform_4, window_bounds = array<i64: 1, 128>}, {transform_indices = @transform_5, window_bounds = array<i64: 4, 16, 128>}]} {
    %c0 = arith.constant 0 : index
    %c0_0 = arith.constant 0 : index
    %c0_1 = arith.constant 0 : index
    %0 = vector.load %arg1[%c0, %c0_0, %c0_1] : memref<4x16x128xf32, #tpu.memory_space<vmem>>, vector<4x16x128xf32>
    %cst = arith.constant 0.000000e+00 : f32
    %1 = vector.broadcast %cst : f32 to vector<4x1x128xf32>
    %2 = vector.extract_strided_slice %0 {offsets = [0, 0, 0], sizes = [4, 15, 128], strides = [1, 1, 1]} : vector<4x16x128xf32> to vector<4x15x128xf32>
    %3 = tpu.concatenate %1, %2 in 1 : vector<4x1x128xf32>, vector<4x15x128xf32> -> vector<4x16x128xf32>
    %4 = vector.extract_strided_slice %0 {offsets = [0, 1, 0], sizes = [4, 15, 128], strides = [1, 1, 1]} : vector<4x16x128xf32> to vector<4x15x128xf32>
    %5 = tpu.concatenate %4, %1 in 1 : vector<4x15x128xf32>, vector<4x1x128xf32> -> vector<4x16x128xf32>
    %6 = tpu.concatenate %3, %0, %5 in 2 : vector<4x16x128xf32>, vector<4x16x128xf32>, vector<4x16x128xf32> -> vector<4x16x384xf32>
    %7 = vector.shape_cast %6 : vector<4x16x384xf32> to vector<64x384xf32>
    %c0_2 = arith.constant 0 : index
    %c0_3 = arith.constant 0 : index
    %8 = vector.load %arg2[%c0_2, %c0_3] : memref<384x128xf32, #tpu.memory_space<vmem>>, vector<384x128xf32>
    %cst_4 = arith.constant dense<0.000000e+00> : vector<64x128xf32>
    %9 = tpu.matmul %7, %8, %cst_4 {dimension_numbers = #tpu.dot_dimension_numbers<[1], [0], [0], [1], [0, 0, 1, 1], [], []>} : vector<64x384xf32>, vector<384x128xf32>, vector<64x128xf32> -> vector<64x128xf32>
    %c0_5 = arith.constant 0 : index
    %c0_6 = arith.constant 0 : index
    %10 = vector.load %arg3[%c0_5, %c0_6] : memref<1x128xf32, #tpu.memory_space<vmem>>, vector<1x128xf32>
    %11 = vector.broadcast %10 : vector<1x128xf32> to vector<64x128xf32>
    %12 = arith.addf %9, %11 : vector<64x128xf32>
    %cst_7 = arith.constant 0.000000e+00 : f32
    %13 = vector.broadcast %cst_7 : f32 to vector<64x128xf32>
    %14 = arith.maximumf %12, %13 : vector<64x128xf32>
    %15 = vector.shape_cast %14 : vector<64x128xf32> to vector<4x16x128xf32>
    %cst_8 = arith.constant 0.000000e+00 : f32
    %16 = vector.broadcast %cst_8 : f32 to vector<4x1x128xf32>
    %17 = vector.extract_strided_slice %15 {offsets = [0, 0, 0], sizes = [4, 15, 128], strides = [1, 1, 1]} : vector<4x16x128xf32> to vector<4x15x128xf32>
    %18 = tpu.concatenate %16, %17 in 1 : vector<4x1x128xf32>, vector<4x15x128xf32> -> vector<4x16x128xf32>
    %19 = vector.extract_strided_slice %15 {offsets = [0, 1, 0], sizes = [4, 15, 128], strides = [1, 1, 1]} : vector<4x16x128xf32> to vector<4x15x128xf32>
    %20 = tpu.concatenate %19, %16 in 1 : vector<4x15x128xf32>, vector<4x1x128xf32> -> vector<4x16x128xf32>
    %21 = tpu.concatenate %18, %15, %20 in 2 : vector<4x16x128xf32>, vector<4x16x128xf32>, vector<4x16x128xf32> -> vector<4x16x384xf32>
    %22 = vector.shape_cast %21 : vector<4x16x384xf32> to vector<64x384xf32>
    %c0_9 = arith.constant 0 : index
    %c0_10 = arith.constant 0 : index
    %23 = vector.load %arg4[%c0_9, %c0_10] : memref<384x128xf32, #tpu.memory_space<vmem>>, vector<384x128xf32>
    %cst_11 = arith.constant dense<0.000000e+00> : vector<64x128xf32>
    %24 = tpu.matmul %22, %23, %cst_11 {dimension_numbers = #tpu.dot_dimension_numbers<[1], [0], [0], [1], [0, 0, 1, 1], [], []>} : vector<64x384xf32>, vector<384x128xf32>, vector<64x128xf32> -> vector<64x128xf32>
    %c0_12 = arith.constant 0 : index
    %c0_13 = arith.constant 0 : index
    %25 = vector.load %arg5[%c0_12, %c0_13] : memref<1x128xf32, #tpu.memory_space<vmem>>, vector<1x128xf32>
    %26 = vector.broadcast %25 : vector<1x128xf32> to vector<64x128xf32>
    %27 = arith.addf %24, %26 : vector<64x128xf32>
    %28 = vector.shape_cast %27 : vector<64x128xf32> to vector<4x16x128xf32>
    %29 = arith.addf %0, %28 : vector<4x16x128xf32>
    %c0_14 = arith.constant 0 : index
    %c0_15 = arith.constant 0 : index
    %c0_16 = arith.constant 0 : index
    %30 = vector.load %arg6[%c0_14, %c0_15, %c0_16] : memref<4x16x128xf32, #tpu.memory_space<vmem>>, vector<4x16x128xf32>
    tpu.vector_store %arg6[%c0_14, %c0_15, %c0_16], %29 {strides = array<i32>} : memref<4x16x128xf32, #tpu.memory_space<vmem>>, vector<4x16x128xf32>,
    return
  }
  func.func @transform_0(%arg0: i32) -> (i32, i32, i32) {
    %c0_i32 = arith.constant 0 : i32
    %c0_i32_0 = arith.constant 0 : i32
    %c0_i32_1 = arith.constant 0 : i32
    return %arg0, %c0_i32, %c0_i32_0 : i32, i32, i32
  }
  func.func @transform_1(%arg0: i32) -> (i32, i32) {
    %c0_i32 = arith.constant 0 : i32
    %c0_i32_0 = arith.constant 0 : i32
    %c0_i32_1 = arith.constant 0 : i32
    return %c0_i32, %c0_i32_0 : i32, i32
  }
  func.func @transform_2(%arg0: i32) -> (i32, i32) {
    %c0_i32 = arith.constant 0 : i32
    %c0_i32_0 = arith.constant 0 : i32
    %c0_i32_1 = arith.constant 0 : i32
    return %c0_i32, %c0_i32_0 : i32, i32
  }
  func.func @transform_3(%arg0: i32) -> (i32, i32) {
    %c0_i32 = arith.constant 0 : i32
    %c0_i32_0 = arith.constant 0 : i32
    %c0_i32_1 = arith.constant 0 : i32
    return %c0_i32, %c0_i32_0 : i32, i32
  }
  func.func @transform_4(%arg0: i32) -> (i32, i32) {
    %c0_i32 = arith.constant 0 : i32
    %c0_i32_0 = arith.constant 0 : i32
    %c0_i32_1 = arith.constant 0 : i32
    return %c0_i32, %c0_i32_0 : i32, i32
  }
  func.func @transform_5(%arg0: i32) -> (i32, i32, i32) {
    %c0_i32 = arith.constant 0 : i32
    %c0_i32_0 = arith.constant 0 : i32
    %c0_i32_1 = arith.constant 0 : i32
    return %arg0, %c0_i32, %c0_i32_0 : i32, i32, i32
  }
}

</mosaic_0001>

<llo_original>
// kernel: tpu_custom_call.1
$region0: #{tpu_custom_call.1}
  #allocation0 [shape = 'u32[]', space=smem, size = 0x4, offset = 0x4, fixed_abs, tag = 'smem constant byte address 0x4 - core index']
  #allocation1 [shape = 'u32[72,128]{1,0:T(1,128)}', space=vmem, size = 0x9000, scoped, tag = 'internal scratch']
  %s0 = inlined_call_operand.hbm [shape: f32[8,16,128], index: 0, kind: input, shape index: {}]
  %s1 = inlined_call_operand.hbm [shape: f32[384,128], index: 1, kind: input, shape index: {}]
  %s2 = inlined_call_operand.vmem [shape: f32[1,128], index: 2, kind: input, shape index: {}]
  %s3 = inlined_call_operand.hbm [shape: f32[384,128], index: 3, kind: input, shape index: {}]
  %s4 = inlined_call_operand.vmem [shape: f32[1,128], index: 4, kind: input, shape index: {}]
  %s5 = inlined_call_operand.hbm [shape: f32[8,16,128], index: 5, kind: output, shape index: {}]
  %s6 = sld [smem:[#allocation0]]
  $region65: #{tpu_custom_call.1} parent=0
    _
  %s8 = ssub.s32 1, %s6
  %s9 = scalar_select 0, %s8, %s6
  $region1: #{tpu_custom_call.1} parent=0
    #allocation2 [shape = 'u8[65536]{0}', space=vmem, size = 0x10000, scoped, tag = 'input window, operand 0']
    #allocation3 [shape = 's32[2]{0}', space=sflag, size = 0x8, scoped, tag = 'scoped memory for tpu_custom_call.1']
    #allocation4 [shape = 's32[2]{0}', space=sflag, size = 0x8, scoped, tag = 'scoped memory for tpu_custom_call.1']
    #allocation5 [shape = 'u8[196608]{0}', space=vmem, size = 0x30000, scoped, tag = 'input window, operand 1, single buffered']
    #allocation6 [shape = 's32[1]{0}', space=sflag, size = 0x4, scoped, tag = 'scoped memory for tpu_custom_call.1']
    #allocation7 [shape = 'u8[196608]{0}', space=vmem, size = 0x30000, scoped, tag = 'input window, operand 3, single buffered']
    #allocation8 [shape = 'u8[65536]{0}', space=vmem, size = 0x10000, scoped, tag = 'output window, operand 0']
    %10 = vsyncpa [#allocation3], 0
    %s11 = scalar_lea.sflag [#allocation3], 1
    %12 = vsyncpa %s11, 0
    %13 = vsyncpa [#allocation6], 0
    %14 = vsyncpa [#allocation4], 0
    %s15 = scalar_lea.sflag [#allocation4], 1
    %16 = vsyncpa %s15, 0
    loop: start=0, step=1, limit=4
    $region2: #{tpu_custom_call.1} parent=1 // loop_pre_header
      _
    $region3: #{tpu_custom_call.1} parent=1 // loop_header
      %s18 = sphi 0, %s22
      %p19 = scmp.ge.s32.totalorder %s18, 4
      %s28 = sphi 0, %s30
      %s31 = sphi 0, %s28
      %s32 = sphi 0, %s31
      %s48 = sphi 0, %s32
      %s52 = sphi 0, %s52
      %s54 = sphi 0, %s52
      %s55 = sphi 0, %s54
      %s69 = sphi 0, %s55
      %s73 = sphi 0, %s73
      %s75 = sphi 0, %s73
      %s76 = sphi 0, %s75
      %s90 = sphi 0, %s76
      %s94 = sphi 0, %s94
      %s96 = sphi 0, %s94
      %s97 = sphi 0, %s96
      %s111 = sphi 0, %s97
      %s115 = sphi 0, %s115
      %s117 = sphi 0, %s115
      %s118 = sphi 0, %s117
      %s132 = sphi 0, %s118
      %s138 = sphi 0, %s140
      %s141 = sphi 0, %s138
      %s142 = sphi 0, %s141
      %s158 = sphi 0, %s142
    $region4: #{tpu_custom_call.1} parent=1 // loop_header_branch
      %21 = sbr.rel (%p19) target = $region8
    $region5: #{tpu_custom_call.1} parent=1 // loop_body
      %s23 = ssub.s32 %s18, 1
      %s24 = ssub.s32 %s18, 2
      %s25 = sadd.s32 %s18, 1
      %s26 = ssub.s32 %s18, %s25
      %p27 = scmp.eq.s32.totalorder %s26, 0
      %s29 = sadd.s32 %s28, 1
      %s30 = scalar_select %p27, %s28, %s29
      %p33 = pneg %p27
      %p34 = scmp.eq.s32.totalorder %s18, 1
      %p35 = por %p33, %p34
      %p36 = scmp.ne.s32.totalorder %s28, %s31
      %p37 = scmp.eq.s32.totalorder %s18, 0
      %p38 = por %p36, %p37
      %p39 = scmp.ne.s32.totalorder %s28, %s31
      %p40 = scmp.eq.s32.totalorder %s23, 1
      %p41 = por %p39, %p40
      %p42 = scmp.ne.s32.totalorder %s31, %s32
      %p43 = scmp.eq.s32.totalorder %s23, 0
      %p44 = por %p42, %p43
      %p45 = scmp.ne.s32.totalorder %s31, %s32
      %p46 = scmp.eq.s32.totalorder %s24, 1
      %p47 = por %p45, %p46
      %p49 = scmp.ne.s32.totalorder %s32, %s48
      %p50 = scmp.eq.s32.totalorder %s24, 0
      %p51 = por %p49, %p50
      %s53 = sadd.s32 %s52, 1
      %p56 = scmp.eq.s32.totalorder %s18, 1
      %p57 = scmp.ne.s32.totalorder %s52, %s54
      %p58 = scmp.eq.s32.totalorder %s18, 0
      %p59 = por %p57, %p58
      %p60 = scmp.ne.s32.totalorder %s52, %s54
      %p61 = scmp.eq.s32.totalorder %s23, 1
      %p62 = por %p60, %p61
      %p63 = scmp.ne.s32.totalorder %s54, %s55
      %p64 = scmp.eq.s32.totalorder %s23, 0
      %p65 = por %p63, %p64
      %p66 = scmp.ne.s32.totalorder %s54, %s55
      %p67 = scmp.eq.s32.totalorder %s24, 1
      %p68 = por %p66, %p67
      %p70 = scmp.ne.s32.totalorder %s55, %s69
      %p71 = scmp.eq.s32.totalorder %s24, 0
      %p72 = por %p70, %p71
      %s74 = sadd.s32 %s73, 1
      %p77 = scmp.eq.s32.totalorder %s18, 1
      %p78 = scmp.ne.s32.totalorder %s73, %s75
      %p79 = scmp.eq.s32.totalorder %s18, 0
      %p80 = por %p78, %p79
      %p81 = scmp.ne.s32.totalorder %s73, %s75
      %p82 = scmp.eq.s32.totalorder %s23, 1
      %p83 = por %p81, %p82
      %p84 = scmp.ne.s32.totalorder %s75, %s76
      %p85 = scmp.eq.s32.totalorder %s23, 0
      %p86 = por %p84, %p85
      %p87 = scmp.ne.s32.totalorder %s75, %s76
      %p88 = scmp.eq.s32.totalorder %s24, 1
      %p89 = por %p87, %p88
      %p91 = scmp.ne.s32.totalorder %s76, %s90
      %p92 = scmp.eq.s32.totalorder %s24, 0
      %p93 = por %p91, %p92
      %s95 = sadd.s32 %s94, 1
      %p98 = scmp.eq.s32.totalorder %s18, 1
      %p99 = scmp.ne.s32.totalorder %s94, %s96
      %p100 = scmp.eq.s32.totalorder %s18, 0
      %p101 = por %p99, %p100
      %p102 = scmp.ne.s32.totalorder %s94, %s96
      %p103 = scmp.eq.s32.totalorder %s23, 1
      %p104 = por %p102, %p103
      %p105 = scmp.ne.s32.totalorder %s96, %s97
      %p106 = scmp.eq.s32.totalorder %s23, 0
      %p107 = por %p105, %p106
      %p108 = scmp.ne.s32.totalorder %s96, %s97
      %p109 = scmp.eq.s32.totalorder %s24, 1
      %p110 = por %p108, %p109
      %p112 = scmp.ne.s32.totalorder %s97, %s111
      %p113 = scmp.eq.s32.totalorder %s24, 0
      %p114 = por %p112, %p113
      %s116 = sadd.s32 %s115, 1
      %p119 = scmp.eq.s32.totalorder %s18, 1
      %p120 = scmp.ne.s32.totalorder %s115, %s117
      %p121 = scmp.eq.s32.totalorder %s18, 0
      %p122 = por %p120, %p121
      %p123 = scmp.ne.s32.totalorder %s115, %s117
      %p124 = scmp.eq.s32.totalorder %s23, 1
      %p125 = por %p123, %p124
      %p126 = scmp.ne.s32.totalorder %s117, %s118
      %p127 = scmp.eq.s32.totalorder %s23, 0
      %p128 = por %p126, %p127
      %p129 = scmp.ne.s32.totalorder %s117, %s118
      %p130 = scmp.eq.s32.totalorder %s24, 1
      %p131 = por %p129, %p130
      %p133 = scmp.ne.s32.totalorder %s118, %s132
      %p134 = scmp.eq.s32.totalorder %s24, 0
      %p135 = por %p133, %p134
      %s136 = ssub.s32 %s18, %s25
      %p137 = scmp.eq.s32.totalorder %s136, 0
      %s139 = sadd.s32 %s138, 1
      %s140 = scalar_select %p137, %s138, %s139
      %p143 = pneg %p137
      %p144 = scmp.eq.s32.totalorder %s18, 1
      %p145 = por %p143, %p144
      %p146 = scmp.ne.s32.totalorder %s138, %s141
      %p147 = scmp.eq.s32.totalorder %s18, 0
      %p148 = por %p146, %p147
      %p149 = scmp.ne.s32.totalorder %s138, %s141
      %p150 = scmp.eq.s32.totalorder %s23, 1
      %p151 = por %p149, %p150
      %p152 = scmp.ne.s32.totalorder %s141, %s142
      %p153 = scmp.eq.s32.totalorder %s23, 0
      %p154 = por %p152, %p153
      %p155 = scmp.ne.s32.totalorder %s141, %s142
      %p156 = scmp.eq.s32.totalorder %s24, 1
      %p157 = por %p155, %p156
      %p159 = scmp.ne.s32.totalorder %s142, %s158
      %p160 = scmp.eq.s32.totalorder %s24, 0
      %p161 = por %p159, %p160
      %p162 = scmp.le.s32.totalorder 1, %s18
      %p163 = scmp.lt.s32.totalorder %s18, 3
      %p164 = pnand %p162, %p163
      %p165 = pneg %p164
      // Predicated region
      $region9: #{tpu_custom_call.1} parent=5 // pred_check
        _
      $region10: #{tpu_custom_call.1} parent=5 // pred_check_branch
        %167 = sbr.rel (%p164) target = $region12
      $region11: #{tpu_custom_call.1} parent=5 // pred_region
        %s168 = ssub.s32 %s18, 1
        // Predicated region
        $region13: #{tpu_custom_call.1} parent=11 // pred_check
          %p169 = pneg %p65
        $region14: #{tpu_custom_call.1} parent=11 // pred_check_branch
          %171 = sbr.rel (%p169) target = $region16
        $region15: #{tpu_custom_call.1} parent=11 // pred_region
          %173 = vsyncadd [#allocation6], 0
          %s174 = sshll.u32 %s1, 4
          %s175 = int_to_ptr.hbm [resolvable:$true] %s174
          %s176 = sshll.u32 [#allocation5], 4
          %s177 = int_to_ptr.vmem [resolvable:$true] %s176
          %182 = dma.hbm_to_vmem [thread:$0]  %s175, 6144, %s177, [#allocation6], 128, 128, 8
        $region16: #{tpu_custom_call.1} parent=11 // pred_fallthru
          _
        // Predicated region
        $region17: #{tpu_custom_call.1} parent=11 // pred_check
          %p183 = pneg %p86
        $region18: #{tpu_custom_call.1} parent=11 // pred_check_branch
          %185 = sbr.rel (%p183) target = $region20
        $region19: #{tpu_custom_call.1} parent=11 // pred_region
          _
        $region20: #{tpu_custom_call.1} parent=11 // pred_fallthru
          _
        // Predicated region
        $region21: #{tpu_custom_call.1} parent=11 // pred_check
          %p186 = pneg %p107
        $region22: #{tpu_custom_call.1} parent=11 // pred_check_branch
          %188 = sbr.rel (%p186) target = $region24
        $region23: #{tpu_custom_call.1} parent=11 // pred_region
          %190 = vsyncadd [#allocation6], 0
          %s191 = sshll.u32 %s3, 4
          %s192 = int_to_ptr.hbm [resolvable:$true] %s191
          %s193 = sshll.u32 [#allocation7], 4
          %s194 = int_to_ptr.vmem [resolvable:$true] %s193
          %199 = dma.hbm_to_vmem [thread:$0]  %s192, 6144, %s194, [#allocation6], 128, 128, 8
        $region24: #{tpu_custom_call.1} parent=11 // pred_fallthru
          _
        // Predicated region
        $region25: #{tpu_custom_call.1} parent=11 // pred_check
          %p200 = pneg %p128
        $region26: #{tpu_custom_call.1} parent=11 // pred_check_branch
          %202 = sbr.rel (%p200) target = $region28
        $region27: #{tpu_custom_call.1} parent=11 // pred_region
          _
        $region28: #{tpu_custom_call.1} parent=11 // pred_fallthru
          _
      $region12: #{tpu_custom_call.1} parent=5 // pred_fallthru
        _
      %p203 = scmp.lt.s32.totalorder %s18, 2
      // Predicated region
      $region29: #{tpu_custom_call.1} parent=5 // pred_check
        %p204 = pneg %p203
      $region30: #{tpu_custom_call.1} parent=5 // pred_check_branch
        %206 = sbr.rel (%p204) target = $region32
      $region31: #{tpu_custom_call.1} parent=5 // pred_region
        // Predicated region
        $region33: #{tpu_custom_call.1} parent=31 // pred_check
          %p207 = pneg %p38
        $region34: #{tpu_custom_call.1} parent=31 // pred_check_branch
          %209 = sbr.rel (%p207) target = $region36
        $region35: #{tpu_custom_call.1} parent=31 // pred_region
          %s210 = sand.u32 %s28, 1
          %s211 = scalar_lea.sflag [#allocation3], %s210
          %s212 = sand.u32 %s28, 1
          %s213 = smul.addr %s212, 64
          %s214 = scalar_lea.vmem [#allocation2], %s213
          %s215 = smul.u32 4, %s18
          %217 = vsyncadd %s211, 0
          %s218 = smul.addr %s215, 2
          %s219 = smul.addr %s218, 8
          %s220 = scalar_lea.hbm %s0, %s219
          %s221 = sshll.u32 %s220, 4
          %s222 = int_to_ptr.hbm [resolvable:$true] %s221
          %s223 = sshll.u32 %s214, 4
          %s224 = int_to_ptr.vmem [resolvable:$true] %s223
          %229 = dma.hbm_to_vmem [thread:$0]  %s222, 1024, %s224, %s211, 128, 128, 8
        $region36: #{tpu_custom_call.1} parent=31 // pred_fallthru
          _
      $region32: #{tpu_custom_call.1} parent=5 // pred_fallthru
        _
      %p230 = scmp.le.s32.totalorder 1, %s18
      %p231 = scmp.lt.s32.totalorder %s18, 3
      %p232 = pnand %p230, %p231
      %p233 = pneg %p232
      // Predicated region
      $region37: #{tpu_custom_call.1} parent=5 // pred_check
        _
      $region38: #{tpu_custom_call.1} parent=5 // pred_check_branch
        %235 = sbr.rel (%p232) target = $region40
      $region39: #{tpu_custom_call.1} parent=5 // pred_region
        %s236 = ssub.s32 %s18, 1
        %s237 = sand.u32 %s31, 1
        %s238 = scalar_lea.sflag [#allocation3], %s237
        %s239 = sand.u32 %s31, 1
        %s240 = smul.addr %s239, 64
        %s241 = scalar_lea.vmem [#allocation2], %s240
        // Predicated region
        $region41: #{tpu_custom_call.1} parent=39 // pred_check
          %p242 = pneg %p44
        $region42: #{tpu_custom_call.1} parent=39 // pred_check_branch
          %244 = sbr.rel (%p242) target = $region44
        $region43: #{tpu_custom_call.1} parent=39 // pred_region
          %246 = dma.done %s238, 1024
        $region44: #{tpu_custom_call.1} parent=39 // pred_fallthru
          _
        // Predicated region
        $region45: #{tpu_custom_call.1} parent=39 // pred_check
          %p247 = pneg %p65
        $region46: #{tpu_custom_call.1} parent=39 // pred_check_branch
          %249 = sbr.rel (%p247) target = $region48
        $region47: #{tpu_custom_call.1} parent=39 // pred_region
          %251 = dma.done [#allocation6], 6144
        $region48: #{tpu_custom_call.1} parent=39 // pred_fallthru
          _
        // Predicated region
        $region49: #{tpu_custom_call.1} parent=39 // pred_check
          %p252 = pneg %p107
        $region50: #{tpu_custom_call.1} parent=39 // pred_check_branch
          %254 = sbr.rel (%p252) target = $region52
        $region51: #{tpu_custom_call.1} parent=39 // pred_region
          %256 = dma.done [#allocation6], 6144
        $region52: #{tpu_custom_call.1} parent=39 // pred_fallthru
          _
        %s257 = sand.u32 %s31, 1
        %s258 = scalar_lea.sflag [#allocation3], %s257
        %s259 = sand.u32 %s31, 1
        %s260 = smul.addr %s259, 64
        %s261 = scalar_lea.vmem [#allocation2], %s260
        %p262 = pneg %p44
        %p263 = pneg %p41
        %p264 = pneg %p65
        %p265 = pneg %p62
        %p266 = pneg %p86
        %p267 = pneg %p83
        %p268 = pneg %p107
        %p269 = pneg %p104
        %p270 = pneg %p128
        %p271 = pneg %p125
        %p272 = pneg %p154
        %p273 = pneg %p151
        %s274 = sand.u32 %s141, 1
        %s275 = scalar_lea.sflag [#allocation4], %s274
        %s276 = sand.u32 %s141, 1
        %s277 = smul.addr %s276, 64
        %s278 = scalar_lea.vmem [#allocation8], %s277
        %s279 = smul.u32 4, %s23
        %s280 = smul.u32 4, %s23
        %v281 = vld [vmem:[%s241] sm:$0xff]
        %v282 = vld [vmem:[%s241 + $0x8] sm:$0xff]
        %v283 = vld [vmem:[%s241 + $0x10] sm:$0xff]
        %v284 = vld [vmem:[%s241 + $0x18] sm:$0xff]
        %v285 = vld [vmem:[%s241 + $0x20] sm:$0xff]
        %v286 = vld [vmem:[%s241 + $0x28] sm:$0xff]
        %v287 = vld [vmem:[%s241 + $0x30] sm:$0xff]
        %v288 = vld [vmem:[%s241 + $0x38] sm:$0xff]
        %vm297 = vcmask 1040384
        %v298 = vrot.slane %v281, 7
        %v299 = vrot.slane %v282, 7
        %v300 = vsel %vm297, %v298, %v299
        %v301 = vrot.slane %v283, 7
        %v302 = vrot.slane %v284, 7
        %v303 = vsel %vm297, %v301, %v302
        %v304 = vrot.slane %v285, 7
        %v305 = vrot.slane %v286, 7
        %v306 = vsel %vm297, %v304, %v305
        %v307 = vrot.slane %v287, 7
        %v308 = vrot.slane %v288, 7
        %v309 = vsel %vm297, %v307, %v308
        %v318 = vsel %vm297, 0.0, %v298
        %v319 = vsel %vm297, 0.0, %v301
        %v320 = vsel %vm297, 0.0, %v304
        %v321 = vsel %vm297, 0.0, %v307
        %vm322 = vcmask 1046528
        %v323 = vrot.slane %v281, 1
        %v324 = vrot.slane %v282, 1
        %v325 = vsel %vm322, %v323, %v324
        %v326 = vrot.slane %v283, 1
        %v327 = vrot.slane %v284, 1
        %v328 = vsel %vm322, %v326, %v327
        %v329 = vrot.slane %v285, 1
        %v330 = vrot.slane %v286, 1
        %v331 = vsel %vm322, %v329, %v330
        %v332 = vrot.slane %v287, 1
        %v333 = vrot.slane %v288, 1
        %v334 = vsel %vm322, %v332, %v333
        %v343 = vsel %vm322, %v324, 0.0
        %v344 = vsel %vm322, %v327, 0.0
        %v345 = vsel %vm322, %v330, 0.0
        %v346 = vsel %vm322, %v333, 0.0
        %v347 = vld [vmem:[#allocation5] sm:$0xff]
        %v348 = vld [vmem:[#allocation5 + $0x8] sm:$0xff]
        %v349 = vld [vmem:[#allocation5 + $0x10] sm:$0xff]
        %v350 = vld [vmem:[#allocation5 + $0x18] sm:$0xff]
        %v351 = vld [vmem:[#allocation5 + $0x20] sm:$0xff]
        %v352 = vld [vmem:[#allocation5 + $0x28] sm:$0xff]
        %v353 = vld [vmem:[#allocation5 + $0x30] sm:$0xff]
        %v354 = vld [vmem:[#allocation5 + $0x38] sm:$0xff]
        %v355 = vld [vmem:[#allocation5 + $0x40] sm:$0xff]
        %v356 = vld [vmem:[#allocation5 + $0x48] sm:$0xff]
        %v357 = vld [vmem:[#allocation5 + $0x50] sm:$0xff]
        %v358 = vld [vmem:[#allocation5 + $0x58] sm:$0xff]
        %v359 = vld [vmem:[#allocation5 + $0x60] sm:$0xff]
        %v360 = vld [vmem:[#allocation5 + $0x68] sm:$0xff]
        %v361 = vld [vmem:[#allocation5 + $0x70] sm:$0xff]
        %v362 = vld [vmem:[#allocation5 + $0x78] sm:$0xff]
        %v363 = vld [vmem:[#allocation5 + $0x80] sm:$0xff]
        %v364 = vld [vmem:[#allocation5 + $0x88] sm:$0xff]
        %v365 = vld [vmem:[#allocation5 + $0x90] sm:$0xff]
        %v366 = vld [vmem:[#allocation5 + $0x98] sm:$0xff]
        %v367 = vld [vmem:[#allocation5 + $0xa0] sm:$0xff]
        %v368 = vld [vmem:[#allocation5 + $0xa8] sm:$0xff]
        %v369 = vld [vmem:[#allocation5 + $0xb0] sm:$0xff]
        %v370 = vld [vmem:[#allocation5 + $0xb8] sm:$0xff]
        %v371 = vld [vmem:[#allocation5 + $0xc0] sm:$0xff]
        %v372 = vld [vmem:[#allocation5 + $0xc8] sm:$0xff]
        %v373 = vld [vmem:[#allocation5 + $0xd0] sm:$0xff]
        %v374 = vld [vmem:[#allocation5 + $0xd8] sm:$0xff]
        %v375 = vld [vmem:[#allocation5 + $0xe0] sm:$0xff]
        %v376 = vld [vmem:[#allocation5 + $0xe8] sm:$0xff]
        %v377 = vld [vmem:[#allocation5 + $0xf0] sm:$0xff]
        %v378 = vld [vmem:[#allocation5 + $0xf8] sm:$0xff]
        %v379 = vld [vmem:[#allocation5 + $0x100] sm:$0xff]
        %v380 = vld [vmem:[#allocation5 + $0x108] sm:$0xff]
        %v381 = vld [vmem:[#allocation5 + $0x110] sm:$0xff]
        %v382 = vld [vmem:[#allocation5 + $0x118] sm:$0xff]
        %v383 = vld [vmem:[#allocation5 + $0x120] sm:$0xff]
        %v384 = vld [vmem:[#allocation5 + $0x128] sm:$0xff]
        %v385 = vld [vmem:[#allocation5 + $0x130] sm:$0xff]
        %v386 = vld [vmem:[#allocation5 + $0x138] sm:$0xff]
        %v387 = vld [vmem:[#allocation5 + $0x140] sm:$0xff]
        %v388 = vld [vmem:[#allocation5 + $0x148] sm:$0xff]
        %v389 = vld [vmem:[#allocation5 + $0x150] sm:$0xff]
        %v390 = vld [vmem:[#allocation5 + $0x158] sm:$0xff]
        %v391 = vld [vmem:[#allocation5 + $0x160] sm:$0xff]
        %v392 = vld [vmem:[#allocation5 + $0x168] sm:$0xff]
        %v393 = vld [vmem:[#allocation5 + $0x170] sm:$0xff]
        %v394 = vld [vmem:[#allocation5 + $0x178] sm:$0xff]
        %v395 = vld [vmem:[%s2] sm:$0x1]
        %v397 = vperm.slane %v395, 0
        %399 = vmatpush.msra.mxu0 %v362
        %400 = vmatpush.msra.mxu0 %v361
        %401 = vmatpush.msra.mxu0 %v360
        %402 = vmatpush.msra.mxu0 %v359
        %403 = vmatpush.msra.mxu0 %v358
        %404 = vmatpush.msra.mxu0 %v357
        %405 = vmatpush.msra.mxu0 %v356
        %406 = vmatpush.msra.mxu0 %v355
        %407 = vmatpush.msra.mxu0 %v354
        %408 = vmatpush.msra.mxu0 %v353
        %409 = vmatpush.msra.mxu0 %v352
        %410 = vmatpush.msra.mxu0 %v351
        %411 = vmatpush.msra.mxu0 %v350
        %412 = vmatpush.msra.mxu0 %v349
        %413 = vmatpush.msra.mxu0 %v348
        %414 = vmatpush.msra.mxu0 %v347
        %415 = vmatmul.f32.gmra.mxu0 %v318
        %v416 = vpop.f32.mrf.mxu0
        %v417 = vadd.f32 %v397, %v416
        %418 = vmatmul.f32.gmra.mxu0 %v300
        %v419 = vpop.f32.mrf.mxu0
        %v420 = vadd.f32 %v397, %v419
        %421 = vmatmul.f32.gmra.mxu0 %v319
        %v422 = vpop.f32.mrf.mxu0
        %v423 = vadd.f32 %v397, %v422
        %424 = vmatmul.f32.gmra.mxu0 %v303
        %v425 = vpop.f32.mrf.mxu0
        %v426 = vadd.f32 %v397, %v425
        %427 = vmatmul.f32.gmra.mxu0 %v320
        %v428 = vpop.f32.mrf.mxu0
        %v429 = vadd.f32 %v397, %v428
        %430 = vmatmul.f32.gmra.mxu0 %v306
        %v431 = vpop.f32.mrf.mxu0
        %v432 = vadd.f32 %v397, %v431
        %433 = vmatmul.f32.gmra.mxu0 %v321
        %v434 = vpop.f32.mrf.mxu0
        %v435 = vadd.f32 %v397, %v434
        %436 = vmatmul.f32.gmra.mxu0 %v309
        %v437 = vpop.f32.mrf.mxu0
        %v438 = vadd.f32 %v397, %v437
        %439 = vdwg.mxu0
        %440 = vmatpush.msra.mxu0 %v378
        %441 = vmatpush.msra.mxu0 %v377
        %442 = vmatpush.msra.mxu0 %v376
        %443 = vmatpush.msra.mxu0 %v375
        %444 = vmatpush.msra.mxu0 %v374
        %445 = vmatpush.msra.mxu0 %v373
        %446 = vmatpush.msra.mxu0 %v372
        %447 = vmatpush.msra.mxu0 %v371
        %448 = vmatpush.msra.mxu0 %v370
        %449 = vmatpush.msra.mxu0 %v369
        %450 = vmatpush.msra.mxu0 %v368
        %451 = vmatpush.msra.mxu0 %v367
        %452 = vmatpush.msra.mxu0 %v366
        %453 = vmatpush.msra.mxu0 %v365
        %454 = vmatpush.msra.mxu0 %v364
        %455 = vmatpush.msra.mxu0 %v363
        %456 = vmatmul.f32.gmra.mxu0 %v281
        %v457 = vpop.f32.mrf.mxu0
        %v458 = vadd.f32 %v417, %v457
        %459 = vmatmul.f32.gmra.mxu0 %v282
        %v460 = vpop.f32.mrf.mxu0
        %v461 = vadd.f32 %v420, %v460
        %462 = vmatmul.f32.gmra.mxu0 %v283
        %v463 = vpop.f32.mrf.mxu0
        %v464 = vadd.f32 %v423, %v463
        %465 = vmatmul.f32.gmra.mxu0 %v284
        %v466 = vpop.f32.mrf.mxu0
        %v467 = vadd.f32 %v426, %v466
        %468 = vmatmul.f32.gmra.mxu0 %v285
        %v469 = vpop.f32.mrf.mxu0
        %v470 = vadd.f32 %v429, %v469
        %471 = vmatmul.f32.gmra.mxu0 %v286
        %v472 = vpop.f32.mrf.mxu0
        %v473 = vadd.f32 %v432, %v472
        %474 = vmatmul.f32.gmra.mxu0 %v287
        %v475 = vpop.f32.mrf.mxu0
        %v476 = vadd.f32 %v435, %v475
        %477 = vmatmul.f32.gmra.mxu0 %v288
        %v478 = vpop.f32.mrf.mxu0
        %v479 = vadd.f32 %v438, %v478
        %480 = vdwg.mxu0
        %481 = vmatpush.msra.mxu0 %v394
        %482 = vmatpush.msra.mxu0 %v393
        %483 = vmatpush.msra.mxu0 %v392
        %484 = vmatpush.msra.mxu0 %v391
        %485 = vmatpush.msra.mxu0 %v390
        %486 = vmatpush.msra.mxu0 %v389
        %487 = vmatpush.msra.mxu0 %v388
        %488 = vmatpush.msra.mxu0 %v387
        %489 = vmatpush.msra.mxu0 %v386
        %490 = vmatpush.msra.mxu0 %v385
        %491 = vmatpush.msra.mxu0 %v384
        %492 = vmatpush.msra.mxu0 %v383
        %493 = vmatpush.msra.mxu0 %v382
        %494 = vmatpush.msra.mxu0 %v381
        %495 = vmatpush.msra.mxu0 %v380
        %496 = vmatpush.msra.mxu0 %v379
        %497 = vmatmul.f32.gmra.mxu0 %v325
        %v498 = vpop.f32.mrf.mxu0
        %v499 = vadd.f32 %v458, %v498
        %500 = vmatmul.f32.gmra.mxu0 %v343
        %v501 = vpop.f32.mrf.mxu0
        %v502 = vadd.f32 %v461, %v501
        %503 = vmatmul.f32.gmra.mxu0 %v328
        %v504 = vpop.f32.mrf.mxu0
        %v505 = vadd.f32 %v464, %v504
        %506 = vmatmul.f32.gmra.mxu0 %v344
        %v507 = vpop.f32.mrf.mxu0
        %v508 = vadd.f32 %v467, %v507
        %509 = vmatmul.f32.gmra.mxu0 %v331
        %v510 = vpop.f32.mrf.mxu0
        %v511 = vadd.f32 %v470, %v510
        %512 = vmatmul.f32.gmra.mxu0 %v345
        %v513 = vpop.f32.mrf.mxu0
        %v514 = vadd.f32 %v473, %v513
        %515 = vmatmul.f32.gmra.mxu0 %v334
        %v516 = vpop.f32.mrf.mxu0
        %v517 = vadd.f32 %v476, %v516
        %518 = vmatmul.f32.gmra.mxu0 %v346
        %v519 = vpop.f32.mrf.mxu0
        %v520 = vadd.f32 %v479, %v519
        %521 = vdwg.mxu0
        %v522 = vmax.f32 %v499, 0.0
        %v523 = vmax.f32 %v502, 0.0
        %v524 = vmax.f32 %v505, 0.0
        %v525 = vmax.f32 %v508, 0.0
        %v526 = vmax.f32 %v511, 0.0
        %v527 = vmax.f32 %v514, 0.0
        %v528 = vmax.f32 %v517, 0.0
        %v529 = vmax.f32 %v520, 0.0
        %v538 = vrot.slane %v522, 7
        %v539 = vrot.slane %v523, 7
        %v540 = vsel %vm297, %v538, %v539
        %v541 = vrot.slane %v524, 7
        %v542 = vrot.slane %v525, 7
        %v543 = vsel %vm297, %v541, %v542
        %v544 = vrot.slane %v526, 7
        %v545 = vrot.slane %v527, 7
        %v546 = vsel %vm297, %v544, %v545
        %v547 = vrot.slane %v528, 7
        %v548 = vrot.slane %v529, 7
        %v549 = vsel %vm297, %v547, %v548
        %v558 = vsel %vm297, 0.0, %v538
        %v559 = vsel %vm297, 0.0, %v541
        %v560 = vsel %vm297, 0.0, %v544
        %v561 = vsel %vm297, 0.0, %v547
        %v562 = vrot.slane %v522, 1
        %v563 = vrot.slane %v523, 1
        %v564 = vsel %vm322, %v562, %v563
        %v565 = vrot.slane %v524, 1
        %v566 = vrot.slane %v525, 1
        %v567 = vsel %vm322, %v565, %v566
        %v568 = vrot.slane %v526, 1
        %v569 = vrot.slane %v527, 1
        %v570 = vsel %vm322, %v568, %v569
        %v571 = vrot.slane %v528, 1
        %v572 = vrot.slane %v529, 1
        %v573 = vsel %vm322, %v571, %v572
        %v582 = vsel %vm322, %v563, 0.0
        %v583 = vsel %vm322, %v566, 0.0
        %v584 = vsel %vm322, %v569, 0.0
        %v585 = vsel %vm322, %v572, 0.0
        %v586 = vld [vmem:[#allocation7] sm:$0xff]
        %v587 = vld [vmem:[#allocation7 + $0x8] sm:$0xff]
        %v588 = vld [vmem:[#allocation7 + $0x10] sm:$0xff]
        %v589 = vld [vmem:[#allocation7 + $0x18] sm:$0xff]
        %v590 = vld [vmem:[#allocation7 + $0x20] sm:$0xff]
        %v591 = vld [vmem:[#allocation7 + $0x28] sm:$0xff]
        %v592 = vld [vmem:[#allocation7 + $0x30] sm:$0xff]
        %v593 = vld [vmem:[#allocation7 + $0x38] sm:$0xff]
        %v594 = vld [vmem:[#allocation7 + $0x40] sm:$0xff]
        %v595 = vld [vmem:[#allocation7 + $0x48] sm:$0xff]
        %v596 = vld [vmem:[#allocation7 + $0x50] sm:$0xff]
        %v597 = vld [vmem:[#allocation7 + $0x58] sm:$0xff]
        %v598 = vld [vmem:[#allocation7 + $0x60] sm:$0xff]
        %v599 = vld [vmem:[#allocation7 + $0x68] sm:$0xff]
        %v600 = vld [vmem:[#allocation7 + $0x70] sm:$0xff]
        %v601 = vld [vmem:[#allocation7 + $0x78] sm:$0xff]
        %v602 = vld [vmem:[#allocation7 + $0x80] sm:$0xff]
        %v603 = vld [vmem:[#allocation7 + $0x88] sm:$0xff]
        %v604 = vld [vmem:[#allocation7 + $0x90] sm:$0xff]
        %v605 = vld [vmem:[#allocation7 + $0x98] sm:$0xff]
        %v606 = vld [vmem:[#allocation7 + $0xa0] sm:$0xff]
        %v607 = vld [vmem:[#allocation7 + $0xa8] sm:$0xff]
        %v608 = vld [vmem:[#allocation7 + $0xb0] sm:$0xff]
        %v609 = vld [vmem:[#allocation7 + $0xb8] sm:$0xff]
        %v610 = vld [vmem:[#allocation7 + $0xc0] sm:$0xff]
        %v611 = vld [vmem:[#allocation7 + $0xc8] sm:$0xff]
        %v612 = vld [vmem:[#allocation7 + $0xd0] sm:$0xff]
        %v613 = vld [vmem:[#allocation7 + $0xd8] sm:$0xff]
        %v614 = vld [vmem:[#allocation7 + $0xe0] sm:$0xff]
        %v615 = vld [vmem:[#allocation7 + $0xe8] sm:$0xff]
        %v616 = vld [vmem:[#allocation7 + $0xf0] sm:$0xff]
        %v617 = vld [vmem:[#allocation7 + $0xf8] sm:$0xff]
        %v618 = vld [vmem:[#allocation7 + $0x100] sm:$0xff]
        %v619 = vld [vmem:[#allocation7 + $0x108] sm:$0xff]
        %v620 = vld [vmem:[#allocation7 + $0x110] sm:$0xff]
        %v621 = vld [vmem:[#allocation7 + $0x118] sm:$0xff]
        %v622 = vld [vmem:[#allocation7 + $0x120] sm:$0xff]
        %v623 = vld [vmem:[#allocation7 + $0x128] sm:$0xff]
        %v624 = vld [vmem:[#allocation7 + $0x130] sm:$0xff]
        %v625 = vld [vmem:[#allocation7 + $0x138] sm:$0xff]
        %v626 = vld [vmem:[#allocation7 + $0x140] sm:$0xff]
        %v627 = vld [vmem:[#allocation7 + $0x148] sm:$0xff]
        %v628 = vld [vmem:[#allocation7 + $0x150] sm:$0xff]
        %v629 = vld [vmem:[#allocation7 + $0x158] sm:$0xff]
        %v630 = vld [vmem:[#allocation7 + $0x160] sm:$0xff]
        %v631 = vld [vmem:[#allocation7 + $0x168] sm:$0xff]
        %v632 = vld [vmem:[#allocation7 + $0x170] sm:$0xff]
        %v633 = vld [vmem:[#allocation7 + $0x178] sm:$0xff]
        %v634 = vld [vmem:[%s4] sm:$0x1]
        %v636 = vperm.slane %v634, 0
        %638 = vmatpush.msra.mxu0 %v601
        %639 = vmatpush.msra.mxu0 %v600
        %640 = vmatpush.msra.mxu0 %v599
        %641 = vmatpush.msra.mxu0 %v598
        %642 = vmatpush.msra.mxu0 %v597
        %643 = vmatpush.msra.mxu0 %v596
        %644 = vmatpush.msra.mxu0 %v595
        %645 = vmatpush.msra.mxu0 %v594
        %646 = vmatpush.msra.mxu0 %v593
        %647 = vmatpush.msra.mxu0 %v592
        %648 = vmatpush.msra.mxu0 %v591
        %649 = vmatpush.msra.mxu0 %v590
        %650 = vmatpush.msra.mxu0 %v589
        %651 = vmatpush.msra.mxu0 %v588
        %652 = vmatpush.msra.mxu0 %v587
        %653 = vmatpush.msra.mxu0 %v586
        %654 = vmatmul.f32.gmra.mxu0 %v558
        %v655 = vpop.f32.mrf.mxu0
        %v656 = vadd.f32 %v636, %v655
        %657 = vmatmul.f32.gmra.mxu0 %v540
        %v658 = vpop.f32.mrf.mxu0
        %v659 = vadd.f32 %v636, %v658
        %660 = vmatmul.f32.gmra.mxu0 %v559
        %v661 = vpop.f32.mrf.mxu0
        %v662 = vadd.f32 %v636, %v661
        %663 = vmatmul.f32.gmra.mxu0 %v543
        %v664 = vpop.f32.mrf.mxu0
        %v665 = vadd.f32 %v636, %v664
        %666 = vmatmul.f32.gmra.mxu0 %v560
        %v667 = vpop.f32.mrf.mxu0
        %v668 = vadd.f32 %v636, %v667
        %669 = vmatmul.f32.gmra.mxu0 %v546
        %v670 = vpop.f32.mrf.mxu0
        %v671 = vadd.f32 %v636, %v670
        %672 = vmatmul.f32.gmra.mxu0 %v561
        %v673 = vpop.f32.mrf.mxu0
        %v674 = vadd.f32 %v636, %v673
        %675 = vmatmul.f32.gmra.mxu0 %v549
        %v676 = vpop.f32.mrf.mxu0
        %v677 = vadd.f32 %v636, %v676
        %678 = vdwg.mxu0
        %679 = vmatpush.msra.mxu0 %v617
        %680 = vmatpush.msra.mxu0 %v616
        %681 = vmatpush.msra.mxu0 %v615
        %682 = vmatpush.msra.mxu0 %v614
        %683 = vmatpush.msra.mxu0 %v613
        %684 = vmatpush.msra.mxu0 %v612
        %685 = vmatpush.msra.mxu0 %v611
        %686 = vmatpush.msra.mxu0 %v610
        %687 = vmatpush.msra.mxu0 %v609
        %688 = vmatpush.msra.mxu0 %v608
        %689 = vmatpush.msra.mxu0 %v607
        %690 = vmatpush.msra.mxu0 %v606
        %691 = vmatpush.msra.mxu0 %v605
        %692 = vmatpush.msra.mxu0 %v604
        %693 = vmatpush.msra.mxu0 %v603
        %694 = vmatpush.msra.mxu0 %v602
        %695 = vmatmul.f32.gmra.mxu0 %v522
        %v696 = vpop.f32.mrf.mxu0
        %v697 = vadd.f32 %v656, %v696
        %698 = vmatmul.f32.gmra.mxu0 %v523
        %v699 = vpop.f32.mrf.mxu0
        %v700 = vadd.f32 %v659, %v699
        %701 = vmatmul.f32.gmra.mxu0 %v524
        %v702 = vpop.f32.mrf.mxu0
        %v703 = vadd.f32 %v662, %v702
        %704 = vmatmul.f32.gmra.mxu0 %v525
        %v705 = vpop.f32.mrf.mxu0
        %v706 = vadd.f32 %v665, %v705
        %707 = vmatmul.f32.gmra.mxu0 %v526
        %v708 = vpop.f32.mrf.mxu0
        %v709 = vadd.f32 %v668, %v708
        %710 = vmatmul.f32.gmra.mxu0 %v527
        %v711 = vpop.f32.mrf.mxu0
        %v712 = vadd.f32 %v671, %v711
        %713 = vmatmul.f32.gmra.mxu0 %v528
        %v714 = vpop.f32.mrf.mxu0
        %v715 = vadd.f32 %v674, %v714
        %716 = vmatmul.f32.gmra.mxu0 %v529
        %v717 = vpop.f32.mrf.mxu0
        %v718 = vadd.f32 %v677, %v717
        %719 = vdwg.mxu0
        %720 = vmatpush.msra.mxu0 %v633
        %721 = vmatpush.msra.mxu0 %v632
        %722 = vmatpush.msra.mxu0 %v631
        %723 = vmatpush.msra.mxu0 %v630
        %724 = vmatpush.msra.mxu0 %v629
        %725 = vmatpush.msra.mxu0 %v628
        %726 = vmatpush.msra.mxu0 %v627
        %727 = vmatpush.msra.mxu0 %v626
        %728 = vmatpush.msra.mxu0 %v625
        %729 = vmatpush.msra.mxu0 %v624
        %730 = vmatpush.msra.mxu0 %v623
        %731 = vmatpush.msra.mxu0 %v622
        %732 = vmatpush.msra.mxu0 %v621
        %733 = vmatpush.msra.mxu0 %v620
        %734 = vmatpush.msra.mxu0 %v619
        %735 = vmatpush.msra.mxu0 %v618
        %736 = vmatmul.f32.gmra.mxu0 %v564
        %v737 = vpop.f32.mrf.mxu0
        %v738 = vadd.f32 %v697, %v737
        %739 = vmatmul.f32.gmra.mxu0 %v582
        %v740 = vpop.f32.mrf.mxu0
        %v741 = vadd.f32 %v700, %v740
        %742 = vmatmul.f32.gmra.mxu0 %v567
        %v743 = vpop.f32.mrf.mxu0
        %v744 = vadd.f32 %v703, %v743
        %745 = vmatmul.f32.gmra.mxu0 %v583
        %v746 = vpop.f32.mrf.mxu0
        %v747 = vadd.f32 %v706, %v746
        %748 = vmatmul.f32.gmra.mxu0 %v570
        %v749 = vpop.f32.mrf.mxu0
        %v750 = vadd.f32 %v709, %v749
        %751 = vmatmul.f32.gmra.mxu0 %v584
        %v752 = vpop.f32.mrf.mxu0
        %v753 = vadd.f32 %v712, %v752
        %754 = vmatmul.f32.gmra.mxu0 %v573
        %v755 = vpop.f32.mrf.mxu0
        %v756 = vadd.f32 %v715, %v755
        %757 = vmatmul.f32.gmra.mxu0 %v585
        %v758 = vpop.f32.mrf.mxu0
        %v759 = vadd.f32 %v718, %v758
        %760 = vdwg.mxu0
        %v761 = vadd.f32 %v281, %v738
        %v762 = vadd.f32 %v282, %v741
        %v763 = vadd.f32 %v283, %v744
        %v764 = vadd.f32 %v284, %v747
        %v765 = vadd.f32 %v285, %v750
        %v766 = vadd.f32 %v286, %v753
        %v767 = vadd.f32 %v287, %v756
        %v768 = vadd.f32 %v288, %v759
        %769 = vst [vmem:[%s278] sm:$0xff] %v761
        %770 = vst [vmem:[%s278 + $0x8] sm:$0xff] %v762
        %771 = vst [vmem:[%s278 + $0x10] sm:$0xff] %v763
        %772 = vst [vmem:[%s278 + $0x18] sm:$0xff] %v764
        %773 = vst [vmem:[%s278 + $0x20] sm:$0xff] %v765
        %774 = vst [vmem:[%s278 + $0x28] sm:$0xff] %v766
        %775 = vst [vmem:[%s278 + $0x30] sm:$0xff] %v767
        %776 = vst [vmem:[%s278 + $0x38] sm:$0xff] %v768
        %s777 = sand.u32 %s141, 1
        %s778 = scalar_lea.sflag [#allocation4], %s777
        %s779 = sand.u32 %s141, 1
        %s780 = smul.addr %s779, 64
        %s781 = scalar_lea.vmem [#allocation8], %s780
        // Predicated region
        $region53: #{tpu_custom_call.1} parent=39 // pred_check
          %p782 = pneg %p151
        $region54: #{tpu_custom_call.1} parent=39 // pred_check_branch
          %784 = sbr.rel (%p782) target = $region56
        $region55: #{tpu_custom_call.1} parent=39 // pred_region
          %s785 = smul.u32 4, %s23
          %787 = vsyncadd %s778, 0
          %s788 = smul.addr %s785, 2
          %s789 = smul.addr %s788, 8
          %s790 = scalar_lea.hbm %s5, %s789
          %s791 = sshll.u32 %s781, 4
          %s792 = int_to_ptr.vmem [resolvable:$true] %s791
          %s793 = sshll.u32 %s790, 4
          %s794 = int_to_ptr.hbm [resolvable:$true] %s793
          %799 = dma.vmem_to_hbm [thread:$0]  %s792, 1024, %s794, %s778, 128, 128, 8
        $region56: #{tpu_custom_call.1} parent=39 // pred_fallthru
          _
      $region40: #{tpu_custom_call.1} parent=5 // pred_fallthru
        _
      %p800 = scmp.le.s32.totalorder 2, %s18
      // Predicated region
      $region57: #{tpu_custom_call.1} parent=5 // pred_check
        %p801 = pneg %p800
      $region58: #{tpu_custom_call.1} parent=5 // pred_check_branch
        %803 = sbr.rel (%p801) target = $region60
      $region59: #{tpu_custom_call.1} parent=5 // pred_region
        %s804 = ssub.s32 %s18, 2
        // Predicated region
        $region61: #{tpu_custom_call.1} parent=59 // pred_check
          %p805 = pneg %p157
        $region62: #{tpu_custom_call.1} parent=59 // pred_check_branch
          %807 = sbr.rel (%p805) target = $region64
        $region63: #{tpu_custom_call.1} parent=59 // pred_region
          %s808 = sand.u32 %s142, 1
          %s809 = scalar_lea.sflag [#allocation4], %s808
          %s810 = sand.u32 %s142, 1
          %s811 = smul.addr %s810, 64
          %s812 = scalar_lea.vmem [#allocation8], %s811
          %814 = dma.done %s809, 1024
        $region64: #{tpu_custom_call.1} parent=59 // pred_fallthru
          _
      $region60: #{tpu_custom_call.1} parent=5 // pred_fallthru
        _
    $region6: #{tpu_custom_call.1} parent=1 // loop_footer
      %s22 = sadd.s32 1, %s18
    $region7: #{tpu_custom_call.1} parent=1 // loop_footer_branch
      %17 = sbr.rel target = $region3
    $region8: #{tpu_custom_call.1} parent=1 // loop_exit
      _
    %815 = vsyncpa [#allocation3], 1
    %s816 = scalar_lea.sflag [#allocation3], 1
    %817 = vsyncpa %s816, 1
    %818 = vsyncpa [#allocation6], 1
    %819 = vsyncpa [#allocation4], 1
    %s820 = scalar_lea.sflag [#allocation4], 1
    %821 = vsyncpa %s820, 1

</llo_original>
